<compile_context>
chip_gen: v7x
topology: tpu7x:2x2x1
jax: 0.10.0
libtpu: 0.0.40
codegen_flags: <defaults>
</compile_context>

<pallas_src>
import functools
import math

import jax
import jax.numpy as jnp
from jax.experimental import pallas as pl
from jax.experimental.pallas import tpu as pltpu

_LANE = 128                     # vreg lane width
_SUBLANE = 8                    # vreg sublane count (f32)
_TARGET_TILE_BYTES = 2 << 20    # ~2 MiB per buffer per grid step


def build_pe_table(d_model: int, max_len: int) -> jnp.ndarray:
    """Sinusoidal positional-encoding table (max_len, d_model), matching the PyTorch buffer."""
    position = jnp.arange(max_len, dtype=jnp.float32)[:, None]               # (L, 1)
    div_term = jnp.exp(
        jnp.arange(0, d_model, 2, dtype=jnp.float32) * (-math.log(10000.0) / d_model)
    )                                                                         # (d_model/2,)
    pe = jnp.zeros((max_len, d_model), dtype=jnp.float32)
    pe = pe.at[:, 0::2].set(jnp.sin(position * div_term))
    pe = pe.at[:, 1::2].set(jnp.cos(position * div_term))
    return pe


def _choose_tiles(B: int, N: int, itemsize: int, target_bytes: int = _TARGET_TILE_BYTES):
    """Pick (TILE_B, TILE_N) that satisfy the (8, 128) layout rules with ~target_bytes tiles."""
    max_cols = max(_LANE, target_bytes // itemsize)
    if N <= max_cols:
        tile_n = N                                   # full extent -> always layout-legal
    else:
        tile_n = (max_cols // _LANE) * _LANE         # large multiple of 128 (lane-dense)
    rows_budget = max(1, target_bytes // (tile_n * itemsize))
    if B <= rows_budget:
        tile_b = B                                   # full extent -> always layout-legal
    else:
        tile_b = max(_SUBLANE, (rows_budget // _SUBLANE) * _SUBLANE)
    return tile_b, tile_n


def _pe_kernel_eval(x_ref, pe_ref, o_ref):
    # x_ref / o_ref: (TILE_B, TILE_N); pe_ref: (1, TILE_N) broadcast over rows.
    o_ref[...] = x_ref[...] + pe_ref[...]


def _pe_kernel_train(x_ref, pe_ref, bits_ref, o_ref, *, threshold: int, scale: float):
    # Inverted dropout: keep iff int32 random bits >= threshold, so P(keep) = 1 - p.
    y = x_ref[...] + pe_ref[...]
    keep = bits_ref[...] >= jnp.int32(threshold)
    o_ref[...] = jnp.where(keep, y * jnp.float32(scale), jnp.zeros_like(y))


def positional_encoding(
    x: jnp.ndarray,
    pe_table: jnp.ndarray,
    *,
    dropout_p: float = 0.1,
    training: bool = False,
    rng_key=None,
) -> jnp.ndarray:
    """x: (B, S, D) -> (B, S, D). Adds pe_table[:S] to every batch element, then dropout."""
    B, S, D = x.shape
    N = S * D
    x2 = x.reshape(B, N)                                    # lane-dense 2-D slab (free reshape)
    pe2 = pe_table[:S, :].reshape(1, N).astype(x.dtype)     # one row, broadcast over batch

    tile_b, tile_n = _choose_tiles(B, N, x.dtype.itemsize)
    grid = (pl.cdiv(B, tile_b), pl.cdiv(N, tile_n))
    x_spec = pl.BlockSpec((tile_b, tile_n), lambda i, j: (i, j))
    pe_spec = pl.BlockSpec((1, tile_n), lambda i, j: (0, j))
    out_spec = pl.BlockSpec((tile_b, tile_n), lambda i, j: (i, j))
    compiler_params = pltpu.CompilerParams(
        dimension_semantics=("parallel", "parallel"),   # independent tiles -> megacore on v7x
        vmem_limit_bytes=48 << 20,                      # headroom above scoped defaults, < v7x phys
    )
    out_shape = jax.ShapeDtypeStruct((B, N), x.dtype)

    if (not training) or dropout_p == 0.0:
        out2 = pl.pallas_call(
            _pe_kernel_eval,
            out_shape=out_shape,
            grid=grid,
            in_specs=[x_spec, pe_spec],
            out_specs=out_spec,
            compiler_params=compiler_params,
        )(x2, pe2)
        return out2.reshape(B, S, D)

    if not (0.0 <= dropout_p < 1.0):
        raise ValueError(f"dropout_p must be in [0, 1), got {dropout_p}")
    if rng_key is None:
        rng_key = jax.random.PRNGKey(0)

    # Uniform bits over the full signed int32 range; one compare per element in-kernel.
    bits = jax.lax.bitcast_convert_type(
        jax.random.bits(rng_key, (B, N), dtype=jnp.uint32), jnp.int32
    )
    threshold = int(round(dropout_p * (1 << 32))) - (1 << 31)
    threshold = min(threshold, (1 << 31) - 1)
    scale = 1.0 / (1.0 - dropout_p)
    kernel = functools.partial(_pe_kernel_train, threshold=threshold, scale=scale)

    out2 = pl.pallas_call(
        kernel,
        out_shape=out_shape,
        grid=grid,
        in_specs=[x_spec, pe_spec, x_spec],   # bits tiled identically to x
        out_specs=out_spec,
        compiler_params=compiler_params,
    )(x2, pe2, bits)
    return out2.reshape(B, S, D)


if __name__ == "__main__":
    # Small shapes consistent with the module: (batch, seq, d_model).
    B, S, D = 2, 8, 32
    MAX_LEN = 64
    DROPOUT = 0.1

    key = jax.random.PRNGKey(0)
    kx, kdrop = jax.random.split(key)
    x = jax.random.normal(kx, (B, S, D), dtype=jnp.float32)
    pe_table = build_pe_table(D, MAX_LEN)

    # Eval-mode forward (dropout = identity) -- deterministic path.
    out = positional_encoding(x, pe_table, dropout_p=DROPOUT, training=False)
    out = jax.block_until_ready(out)
    ref = x + pe_table[None, :S, :]
    assert out.shape == (B, S, D)
    assert out.dtype == x.dtype
    assert jnp.allclose(out, ref, atol=1e-6, rtol=1e-6), "eval-mode mismatch vs reference"

    # Training-mode forward (inverted dropout on precomputed random bits).
    # TODO(synk): PyTorch's dropout RNG bit-stream cannot be reproduced exactly;
    # only the distributional semantics (Bernoulli keep, 1/(1-p) scale) are matched.
    out_train = positional_encoding(
        x, pe_table, dropout_p=DROPOUT, training=True, rng_key=kdrop
    )
    out_train = jax.block_until_ready(out_train)
    assert out_train.shape == (B, S, D)
    scale = 1.0 / (1.0 - DROPOUT)
    kept = out_train != 0.0
    assert jnp.allclose(
        jnp.where(kept, out_train, 0.0),
        jnp.where(kept, ref * scale, 0.0),
        atol=1e-5, rtol=1e-5,
    ), "kept values do not match (x + pe) * 1/(1-p)"
    keep_frac = float(jnp.mean(kept.astype(jnp.float32)))
    assert 0.75 <= keep_frac <= 1.0, f"implausible keep fraction {keep_frac}"

    print("KERNEL_OK")
</pallas_src>

<mosaic_0001>
module attributes {stable_mosaic.version = 11 : i64} {
  func.func @_pe_kernel_eval(%arg0: i32, %arg1: i32, %arg2: memref<2x256xf32, #tpu.memory_space<vmem>>, %arg3: memref<1x256xf32, #tpu.memory_space<vmem>>, %arg4: memref<2x256xf32, #tpu.memory_space<vmem>>) attributes {dimension_semantics = [#tpu.dimension_semantics<parallel>, #tpu.dimension_semantics<parallel>], iteration_bounds = array<i64: 1, 1>, scalar_prefetch = 0 : i64, scratch_operands = 0 : i64, tpu.core_type = #tpu.core_type<tc>, window_params = [{transform_indices = @transform_0, window_bounds = array<i64: 2, 256>}, {transform_indices = @transform_1, window_bounds = array<i64: 1, 256>}, {transform_indices = @transform_2, window_bounds = array<i64: 2, 256>}]} {
    %c0 = arith.constant 0 : index
    %c0_0 = arith.constant 0 : index
    %0 = vector.load %arg2[%c0, %c0_0] : memref<2x256xf32, #tpu.memory_space<vmem>>, vector<2x256xf32>
    %c0_1 = arith.constant 0 : index
    %c0_2 = arith.constant 0 : index
    %1 = vector.load %arg3[%c0_1, %c0_2] : memref<1x256xf32, #tpu.memory_space<vmem>>, vector<1x256xf32>
    %2 = vector.broadcast %1 : vector<1x256xf32> to vector<2x256xf32>
    %3 = arith.addf %0, %2 : vector<2x256xf32>
    %c0_3 = arith.constant 0 : index
    %c0_4 = arith.constant 0 : index
    %4 = vector.load %arg4[%c0_3, %c0_4] : memref<2x256xf32, #tpu.memory_space<vmem>>, vector<2x256xf32>
    tpu.vector_store %arg4[%c0_3, %c0_4], %3 {strides = array<i32>} : memref<2x256xf32, #tpu.memory_space<vmem>>, vector<2x256xf32>,
    return
  }
  func.func @transform_0(%arg0: i32, %arg1: i32) -> (i32, i32) {
    %c0_i32 = arith.constant 0 : i32
    return %arg0, %arg1 : i32, i32
  }
  func.func @transform_1(%arg0: i32, %arg1: i32) -> (i32, i32) {
    %c0_i32 = arith.constant 0 : i32
    %c0_i32_0 = arith.constant 0 : i32
    return %c0_i32, %arg1 : i32, i32
  }
  func.func @transform_2(%arg0: i32, %arg1: i32) -> (i32, i32) {
    %c0_i32 = arith.constant 0 : i32
    return %arg0, %arg1 : i32, i32
  }
}

</mosaic_0001>

<llo_original>
// kernel: tpu_custom_call.1
$region0: #{tpu_custom_call.1}
  #allocation0 [shape = 'u32[]', space=smem, size = 0x4, offset = 0x4, fixed_abs, tag = 'smem constant byte address 0x4 - core index']
  #allocation1 [shape = 'u32[144,128]{1,0:T(1,128)}', space=vmem, size = 0x12000, scoped, tag = 'internal scratch']
  %s0 = inlined_call_operand.hbm [shape: f32[2,256], index: 0, kind: input, shape index: {}]
  %s1 = inlined_call_operand.vmem [shape: f32[1,256], index: 1, kind: input, shape index: {}]
  %s2 = inlined_call_operand.hbm [shape: f32[2,256], index: 2, kind: output, shape index: {}]
  %s3 = sld [smem:[#allocation0]]
  $region22: #{tpu_custom_call.1} parent=0
    _
  %s5 = ssub.s32 1, %s3
  %s6 = scalar_select 0, %s5, %s3
  $region1: #{tpu_custom_call.1} parent=0
    #allocation2 [shape = 'u8[2048]{0}', space=vmem, size = 0x800, scoped, tag = 'input window, operand 0, single buffered']
    #allocation3 [shape = 's32[1]{0}', space=sflag, size = 0x4, scoped, tag = 'scoped memory for tpu_custom_call.1']
    #allocation4 [shape = 's32[1]{0}', space=sflag, size = 0x4, scoped, tag = 'scoped memory for tpu_custom_call.1']
    #allocation5 [shape = 'u8[2048]{0}', space=vmem, size = 0x800, scoped, tag = 'output window, operand 0, single buffered']
    %7 = vsyncpa [#allocation3], 0
    %8 = vsyncpa [#allocation4], 0
    // Predicated region
    $region2: #{tpu_custom_call.1} parent=1 // pred_check
      _
    $region3: #{tpu_custom_call.1} parent=1 // pred_check_branch
      %10 = sbr.rel (0) target = $region5
    $region4: #{tpu_custom_call.1} parent=1 // pred_region
      %s12 = ssub.s32 64, 64
      %13 = vsyncadd [#allocation3], %s12
      %s15 = sshll.u32 [#allocation2], 4
      %s16 = int_to_ptr.vmem [resolvable:$true] %s15
      %18 = dma.hbm_to_vmem [thread:$0]  %s0, 64, %s16, [#allocation3]
    $region5: #{tpu_custom_call.1} parent=1 // pred_fallthru
      _
    // Predicated region
    $region6: #{tpu_custom_call.1} parent=1 // pred_check
      _
    $region7: #{tpu_custom_call.1} parent=1 // pred_check_branch
      %20 = sbr.rel (0) target = $region9
    $region8: #{tpu_custom_call.1} parent=1 // pred_region
      _
    $region9: #{tpu_custom_call.1} parent=1 // pred_fallthru
      _
    // Predicated region
    $region10: #{tpu_custom_call.1} parent=1 // pred_check
      _
    $region11: #{tpu_custom_call.1} parent=1 // pred_check_branch
      %22 = sbr.rel (0) target = $region13
    $region12: #{tpu_custom_call.1} parent=1 // pred_region
      %23 = dma.done [#allocation3], 64
    $region13: #{tpu_custom_call.1} parent=1 // pred_fallthru
      _
    %v24 = vld [vmem:[#allocation2] sm:$0xf]
    %v25 = vld [vmem:[%s1] sm:$0x3]
    %v27 = vlaneseq
    %v28 = vshrl.u32 %v27, 7
    %v29 = vsub.s32 0, %v28
    %v30 = vrot.slane %v25, %v29
    %v31 = vlaneseq
    %v32 = vshrl.u32 %v31, 7
    %v33 = vsub.s32 1, %v32
    %v34 = vrot.slane %v25, %v33
    %v35 = vcombine.low %v30, %v34
    %v37 = vunpack.c.l.s4 1983009808
    %v38 = vunpack.c.0.s8 %v37
    %v39 = vlaneseq
    %v40 = vshrl.u32 %v39, 7
    %v41 = vsub.s32 %v38, %v40
    %v42 = vrot.slane %v35, %v41
    %v44 = vadd.f32 %v24, %v42
    %45 = vst [vmem:[#allocation5] sm:$0xf] %v44
    // Predicated region
    $region14: #{tpu_custom_call.1} parent=1 // pred_check
      _
    $region15: #{tpu_custom_call.1} parent=1 // pred_check_branch
      %47 = sbr.rel (0) target = $region17
    $region16: #{tpu_custom_call.1} parent=1 // pred_region
      %s49 = ssub.s32 64, 64
      %50 = vsyncadd [#allocation4], %s49
      %s52 = sshll.u32 [#allocation5], 4
      %s53 = int_to_ptr.vmem [resolvable:$true] %s52
      %55 = dma.vmem_to_hbm [thread:$0]  %s53, 64, %s2, [#allocation4]
    $region17: #{tpu_custom_call.1} parent=1 // pred_fallthru
      _
    // Predicated region
    $region18: #{tpu_custom_call.1} parent=1 // pred_check
      _
    $region19: #{tpu_custom_call.1} parent=1 // pred_check_branch
      %57 = sbr.rel (0) target = $region21
    $region20: #{tpu_custom_call.1} parent=1 // pred_region
      %58 = dma.done [#allocation4], 64
    $region21: #{tpu_custom_call.1} parent=1 // pred_fallthru
      _
    %59 = vsyncpa [#allocation3], 1
    %60 = vsyncpa [#allocation4], 1

</llo_original>
